<compile_context>
chip_gen: v7x
topology: tpu7x:2x2x1
jax: 0.10.0
libtpu: 0.0.40
codegen_flags: <defaults>
</compile_context>

<pallas_src>
import jax
import jax.numpy as jnp
from jax import lax
from jax.experimental import pallas as pl
from jax.experimental.pallas import tpu as pltpu

_TARGET_BLOCK_BYTES = 1 << 20          # ~1 MiB of payload per grid step
_VMEM_LIMIT_BYTES = 32 * 1024 * 1024   # safe on v5e/v6e/v7x


def _largest_divisor_leq(n, cap):
    cap = max(1, min(n, cap))
    for d in range(cap, 0, -1):
        if n % d == 0:
            return d
    return 1


def _pick_row_tile(rows, bytes_per_row, target_bytes):
    """Largest row tile that divides `rows`, is a multiple of 8 (or the full
    extent), and keeps one channel-group tile under target_bytes."""
    if rows * bytes_per_row <= target_bytes:
        return rows
    best = None
    d = 8
    while d < rows:
        if rows % d == 0 and d * bytes_per_row <= target_bytes:
            best = d
        d += 8
    return best if best is not None else rows


def _upscale_kernel(s, Th, W, Cblk, dtype):
    sW = s * W

    def kernel(x_ref, o_ref):
        # In-kernel one-hot lane-interleave matrix: R0[j*W + w, w*s + j] = 1.
        jj = lax.broadcasted_iota(jnp.int32, (s, W, sW), 0)
        ww = lax.broadcasted_iota(jnp.int32, (s, W, sW), 1)
        vv = lax.broadcasted_iota(jnp.int32, (s, W, sW), 2)
        r0 = (vv == ww * s + jj).astype(dtype).reshape(sW, sW)

        # B[(i, c, h), j*W + w] = x[c, i*s + j, h, w]; leading slices + concats.
        rows = []
        for i in range(s):
            bi = jnp.concatenate(
                [x_ref[:, i * s + j, :, :] for j in range(s)], axis=-1)
            rows.append(bi.reshape(Cblk * Th, sW))
        b_all = jnp.concatenate(rows, axis=0)               # (s*Cblk*Th, s*W)

        # Single MXU matmul: g[(i, c, h), w*s + j] = x[c, i*s + j, h, w].
        g = jnp.dot(b_all, r0, preferred_element_type=jnp.float32,
                    precision=lax.Precision.HIGHEST)
        g = g.astype(dtype).reshape(s, Cblk, Th, sW)

        # Output view is (c, h, i*(s*W) + w*s + j): the row interleave is just
        # a lane concat over i -> one dense store of (Cblk, Th, s*s*W).
        o_ref[...] = jnp.concatenate([g[i] for i in range(s)], axis=-1)

    return kernel


def _downscale_kernel(b, Th, W, Cblk, dtype):
    oW = W // b
    bW = b * W

    def kernel(x_ref, o_ref):
        # Input view already packs the b interleaved rows into lanes:
        # z[(c, oh), i*W + w] = x[c, oh*b + i, w].
        z = x_ref[...].reshape(Cblk * Th, bW)

        # One-hot de-interleave matrix built as b*b lane blocks of width oW:
        # R[i*W + ow*b + j, (i*b + j)*oW + ow] = 1.
        ik = lax.broadcasted_iota(jnp.int32, (b, W, oW), 0)
        wk = lax.broadcasted_iota(jnp.int32, (b, W, oW), 1)
        ow = lax.broadcasted_iota(jnp.int32, (b, W, oW), 2)
        cols = []
        for i in range(b):
            for j in range(b):
                cols.append(
                    ((ik == i) & (wk == ow * b + j)).astype(dtype).reshape(bW, oW))
        r = jnp.concatenate(cols, axis=-1)                  # (b*W, b*b*oW)

        g = jnp.dot(z, r, preferred_element_type=jnp.float32,
                    precision=lax.Precision.HIGHEST)
        g = g.astype(dtype).reshape(Cblk, Th, b * b * oW)

        # Assemble the whole (Cblk, b*b, Th, oW) block; single dense store.
        o_ref[...] = jnp.stack(
            [g[:, :, k * oW:(k + 1) * oW] for k in range(b * b)], axis=1)

    return kernel


def pixel_shuffle_ref(x, scale_factor):
    """Pure-JAX reference mirroring the PyTorch pixel_shuffle()."""
    N, C, H, W = x.shape
    if scale_factor >= 1:
        s = int(round(scale_factor))
        oC = C // (s * s)
        v = x.reshape(N, oC, s, s, H, W)
        v = jnp.transpose(v, (0, 1, 4, 2, 5, 3))
        return v.reshape(N, oC, H * s, W * s)
    b = int(round(1.0 / scale_factor))
    oH, oW = H // b, W // b
    v = x.reshape(N, C, oH, b, oW, b)
    v = jnp.transpose(v, (0, 1, 3, 5, 2, 4))
    return v.reshape(N, C * b * b, oH, oW)


def pixel_shuffle_pallas(x, scale_factor):
    N, C, H, W = x.shape
    if not jnp.issubdtype(x.dtype, jnp.floating):
        # TODO(synk): integer / fp8 dtypes need a non-MXU permutation path; use XLA.
        return pixel_shuffle_ref(x, scale_factor)
    itemsize = jnp.dtype(x.dtype).itemsize

    if scale_factor >= 1:
        s = int(round(scale_factor))
        if abs(scale_factor - s) > 1e-9:
            raise ValueError("scale_factor >= 1 must be an integer")
        if s == 1:
            return x
        if C % (s * s) != 0:
            raise ValueError("channels must be divisible by scale_factor**2")
        oC = C // (s * s)
        NC = N * oC
        Th = _pick_row_tile(H, s * s * W * itemsize, _TARGET_BLOCK_BYTES)
        Cblk = _largest_divisor_leq(
            NC, _TARGET_BLOCK_BYTES // max(1, s * s * Th * W * itemsize))
        x5 = x.reshape(NC, s * s, H, W)                     # free view
        out3 = pl.pallas_call(
            _upscale_kernel(s, Th, W, Cblk, x.dtype),
            out_shape=jax.ShapeDtypeStruct((NC, H, s * s * W), x.dtype),
            grid_spec=pltpu.PrefetchScalarGridSpec(
                num_scalar_prefetch=0,
                grid=(NC // Cblk, H // Th),
                in_specs=[pl.BlockSpec((Cblk, s * s, Th, W),
                                       lambda cb, th: (cb, 0, th, 0))],
                out_specs=pl.BlockSpec((Cblk, Th, s * s * W),
                                       lambda cb, th: (cb, th, 0)),
            ),
            compiler_params=pltpu.CompilerParams(
                dimension_semantics=("parallel", "parallel"),
                vmem_limit_bytes=_VMEM_LIMIT_BYTES),
        )(x5)
        # (NC, H, s*s*W) is a contiguous view of (N, oC, H*s, W*s): free reshape.
        return out3.reshape(N, oC, H * s, W * s)

    # Downscale branch: block size b = 1/scale_factor (space-to-depth).
    b = int(round(1.0 / scale_factor))
    if abs(scale_factor * b - 1.0) > 1e-9:
        raise ValueError("1/scale_factor must be an integer for scale_factor < 1")
    if H % b != 0 or W % b != 0:
        raise ValueError("H and W must be divisible by 1/scale_factor")
    oH, oW = H // b, W // b
    NC = N * C
    Th = _pick_row_tile(oH, b * W * itemsize, _TARGET_BLOCK_BYTES)
    Cblk = _largest_divisor_leq(
        NC, _TARGET_BLOCK_BYTES // max(1, Th * b * W * itemsize))
    xv = x.reshape(NC, oH, b * W)                           # free view
    outv = pl.pallas_call(
        _downscale_kernel(b, Th, W, Cblk, x.dtype),
        out_shape=jax.ShapeDtypeStruct((NC, b * b, oH, oW), x.dtype),
        grid_spec=pltpu.PrefetchScalarGridSpec(
            num_scalar_prefetch=0,
            grid=(NC // Cblk, oH // Th),
            in_specs=[pl.BlockSpec((Cblk, Th, b * W),
                                   lambda cb, th: (cb, th, 0))],
            out_specs=pl.BlockSpec((Cblk, b * b, Th, oW),
                                   lambda cb, th: (cb, 0, th, 0)),
        ),
        compiler_params=pltpu.CompilerParams(
            dimension_semantics=("parallel", "parallel"),
            vmem_limit_bytes=_VMEM_LIMIT_BYTES),
    )(xv)
    return outv.reshape(N, C * b * b, oH, oW)               # free view


if __name__ == "__main__":
    key = jax.random.PRNGKey(0)
    x = jax.random.normal(key, (2, 4, 16, 16), jnp.float32)  # N, C, H, W

    # upscale branch (scale_factor = 2): (2, 4, 16, 16) -> (2, 1, 32, 32)
    out_up = jax.block_until_ready(pixel_shuffle_pallas(x, 2))
    ref_up = pixel_shuffle_ref(x, 2)
    assert out_up.shape == (2, 1, 32, 32)
    assert bool(jnp.allclose(out_up, ref_up, rtol=1e-6, atol=1e-6)), (
        "upscale max abs err = %g" % float(jnp.max(jnp.abs(out_up - ref_up))))

    # downscale branch (scale_factor = 0.5): (2, 4, 16, 16) -> (2, 16, 8, 8)
    out_dn = jax.block_until_ready(pixel_shuffle_pallas(x, 0.5))
    ref_dn = pixel_shuffle_ref(x, 0.5)
    assert out_dn.shape == (2, 16, 8, 8)
    assert bool(jnp.allclose(out_dn, ref_dn, rtol=1e-6, atol=1e-6)), (
        "downscale max abs err = %g" % float(jnp.max(jnp.abs(out_dn - ref_dn))))

    # native-dtype path (single MXU pass): bf16 input is handled bit-exactly
    xb = x.astype(jnp.bfloat16)
    out_bf = jax.block_until_ready(pixel_shuffle_pallas(xb, 2))
    assert bool(jnp.array_equal(out_bf, pixel_shuffle_ref(xb, 2)))

    print("KERNEL_OK")
</pallas_src>

<mosaic_0001>
module attributes {stable_mosaic.version = 11 : i64} {
  func.func @kernel(%arg0: i32, %arg1: i32, %arg2: memref<2x4x16x16xf32, #tpu.memory_space<vmem>>, %arg3: memref<2x16x64xf32, #tpu.memory_space<vmem>>) attributes {dimension_semantics = [#tpu.dimension_semantics<parallel>, #tpu.dimension_semantics<parallel>], iteration_bounds = array<i64: 1, 1>, scalar_prefetch = 0 : i64, scratch_operands = 0 : i64, tpu.core_type = #tpu.core_type<tc>, window_params = [{transform_indices = @transform_0, window_bounds = array<i64: 2, 4, 16, 16>}, {transform_indices = @transform_1, window_bounds = array<i64: 2, 16, 64>}]} {
    %0 = tpu.iota {dimensions = array<i32: 0>} : vector<2x16x32xi32>
    %1 = tpu.iota {dimensions = array<i32: 1>} : vector<2x16x32xi32>
    %2 = tpu.iota {dimensions = array<i32: 2>} : vector<2x16x32xi32>
    %c2_i32 = arith.constant 2 : i32
    %3 = vector.broadcast %c2_i32 : i32 to vector<2x16x32xi32>
    %4 = arith.muli %1, %3 : vector<2x16x32xi32>
    %5 = arith.addi %4, %0 : vector<2x16x32xi32>
    %6 = arith.cmpi eq, %2, %5 : vector<2x16x32xi32>
    %7 = arith.extui %6 : vector<2x16x32xi1> to vector<2x16x32xi32>
    %8 = arith.sitofp %7 : vector<2x16x32xi32> to vector<2x16x32xf32>
    %9 = vector.shape_cast %8 : vector<2x16x32xf32> to vector<32x32xf32>
    %c0 = arith.constant 0 : index
    %c0_0 = arith.constant 0 : index
    %c0_1 = arith.constant 0 : index
    %c0_2 = arith.constant 0 : index
    %10 = vector.load %arg2[%c0, %c0_0, %c0_1, %c0_2] : memref<2x4x16x16xf32, #tpu.memory_space<vmem>>, vector<2x1x16x16xf32>
    %11 = vector.shape_cast %10 : vector<2x1x16x16xf32> to vector<2x16x16xf32>
    %c0_3 = arith.constant 0 : index
    %c1 = arith.constant 1 : index
    %c0_4 = arith.constant 0 : index
    %c0_5 = arith.constant 0 : index
    %12 = vector.load %arg2[%c0_3, %c1, %c0_4, %c0_5] : memref<2x4x16x16xf32, #tpu.memory_space<vmem>>, vector<2x1x16x16xf32>
    %13 = vector.shape_cast %12 : vector<2x1x16x16xf32> to vector<2x16x16xf32>
    %14 = tpu.concatenate %11, %13 in 2 : vector<2x16x16xf32>, vector<2x16x16xf32> -> vector<2x16x32xf32>
    %15 = vector.shape_cast %14 : vector<2x16x32xf32> to vector<32x32xf32>
    %c0_6 = arith.constant 0 : index
    %c2 = arith.constant 2 : index
    %c0_7 = arith.constant 0 : index
    %c0_8 = arith.constant 0 : index
    %16 = vector.load %arg2[%c0_6, %c2, %c0_7, %c0_8] : memref<2x4x16x16xf32, #tpu.memory_space<vmem>>, vector<2x1x16x16xf32>
    %17 = vector.shape_cast %16 : vector<2x1x16x16xf32> to vector<2x16x16xf32>
    %c0_9 = arith.constant 0 : index
    %c3 = arith.constant 3 : index
    %c0_10 = arith.constant 0 : index
    %c0_11 = arith.constant 0 : index
    %18 = vector.load %arg2[%c0_9, %c3, %c0_10, %c0_11] : memref<2x4x16x16xf32, #tpu.memory_space<vmem>>, vector<2x1x16x16xf32>
    %19 = vector.shape_cast %18 : vector<2x1x16x16xf32> to vector<2x16x16xf32>
    %20 = tpu.concatenate %17, %19 in 2 : vector<2x16x16xf32>, vector<2x16x16xf32> -> vector<2x16x32xf32>
    %21 = vector.shape_cast %20 : vector<2x16x32xf32> to vector<32x32xf32>
    %22 = tpu.concatenate %15, %21 in 0 : vector<32x32xf32>, vector<32x32xf32> -> vector<64x32xf32>
    %cst = arith.constant dense<0.000000e+00> : vector<64x32xf32>
    %23 = tpu.matmul %22, %9, %cst {dimension_numbers = #tpu.dot_dimension_numbers<[1], [0], [0], [1], [0, 0, 1, 1], [], []>, precision = #tpu.contract_precision<fp32>} : vector<64x32xf32>, vector<32x32xf32>, vector<64x32xf32> -> vector<64x32xf32>
    %24 = vector.shape_cast %23 : vector<64x32xf32> to vector<2x2x16x32xf32>
    %25 = vector.extract_strided_slice %24 {offsets = [0, 0, 0, 0], sizes = [1, 2, 16, 32], strides = [1, 1, 1, 1]} : vector<2x2x16x32xf32> to vector<1x2x16x32xf32>
    %26 = vector.shape_cast %25 : vector<1x2x16x32xf32> to vector<2x16x32xf32>
    %27 = vector.extract_strided_slice %24 {offsets = [1, 0, 0, 0], sizes = [1, 2, 16, 32], strides = [1, 1, 1, 1]} : vector<2x2x16x32xf32> to vector<1x2x16x32xf32>
    %28 = vector.shape_cast %27 : vector<1x2x16x32xf32> to vector<2x16x32xf32>
    %29 = tpu.concatenate %26, %28 in 2 : vector<2x16x32xf32>, vector<2x16x32xf32> -> vector<2x16x64xf32>
    %c0_12 = arith.constant 0 : index
    %c0_13 = arith.constant 0 : index
    %c0_14 = arith.constant 0 : index
    %30 = vector.load %arg3[%c0_12, %c0_13, %c0_14] : memref<2x16x64xf32, #tpu.memory_space<vmem>>, vector<2x16x64xf32>
    tpu.vector_store %arg3[%c0_12, %c0_13, %c0_14], %29 {strides = array<i32>} : memref<2x16x64xf32, #tpu.memory_space<vmem>>, vector<2x16x64xf32>,
    return
  }
  func.func @transform_0(%arg0: i32, %arg1: i32) -> (i32, i32, i32, i32) {
    %c0_i32 = arith.constant 0 : i32
    %c0_i32_0 = arith.constant 0 : i32
    %c0_i32_1 = arith.constant 0 : i32
    return %arg0, %c0_i32, %arg1, %c0_i32_0 : i32, i32, i32, i32
  }
  func.func @transform_1(%arg0: i32, %arg1: i32) -> (i32, i32, i32) {
    %c0_i32 = arith.constant 0 : i32
    %c0_i32_0 = arith.constant 0 : i32
    return %arg0, %arg1, %c0_i32 : i32, i32, i32
  }
}

</mosaic_0001>

<llo_original>
// kernel: tpu_custom_call.1
$region0: #{tpu_custom_call.1}
  #allocation0 [shape = 'u32[]', space=smem, size = 0x4, offset = 0x4, fixed_abs, tag = 'smem constant byte address 0x4 - core index']
  #allocation1 [shape = 'u32[144,128]{1,0:T(1,128)}', space=vmem, size = 0x12000, scoped, tag = 'internal scratch']
  %s0 = inlined_call_operand.hbm [shape: f32[2,4,16,16], index: 0, kind: input, shape index: {}]
  %s1 = inlined_call_operand.hbm [shape: f32[2,16,64], index: 1, kind: output, shape index: {}]
  %s2 = sld [smem:[#allocation0]]
  $region18: #{tpu_custom_call.1} parent=0
    _
  %s4 = ssub.s32 1, %s2
  %s5 = scalar_select 0, %s4, %s2
  $region1: #{tpu_custom_call.1} parent=0
    #allocation2 [shape = 'u8[65536]{0}', space=vmem, size = 0x10000, scoped, tag = 'input window, operand 0, single buffered']
    #allocation3 [shape = 's32[1]{0}', space=sflag, size = 0x4, scoped, tag = 'scoped memory for tpu_custom_call.1']
    #allocation4 [shape = 's32[1]{0}', space=sflag, size = 0x4, scoped, tag = 'scoped memory for tpu_custom_call.1']
    #allocation5 [shape = 'u8[16384]{0}', space=vmem, size = 0x4000, scoped, tag = 'output window, operand 0, single buffered']
    %6 = vsyncpa [#allocation3], 0
    %7 = vsyncpa [#allocation4], 0
    // Predicated region
    $region2: #{tpu_custom_call.1} parent=1 // pred_check
      _
    $region3: #{tpu_custom_call.1} parent=1 // pred_check_branch
      %9 = sbr.rel (0) target = $region5
    $region4: #{tpu_custom_call.1} parent=1 // pred_region
      %s11 = ssub.s32 2048, 2048
      %12 = vsyncadd [#allocation3], %s11
      %s13 = sshll.u32 [#allocation2], 4
      %s14 = int_to_ptr.vmem [resolvable:$true] %s13
      %19 = dma.hbm_to_vmem [thread:$0]  %s0, 2048, %s14, [#allocation3], 128, 128, 8
    $region5: #{tpu_custom_call.1} parent=1 // pred_fallthru
      _
    // Predicated region
    $region6: #{tpu_custom_call.1} parent=1 // pred_check
      _
    $region7: #{tpu_custom_call.1} parent=1 // pred_check_branch
      %21 = sbr.rel (0) target = $region9
    $region8: #{tpu_custom_call.1} parent=1 // pred_region
      %22 = dma.done [#allocation3], 2048
    $region9: #{tpu_custom_call.1} parent=1 // pred_fallthru
      _
    %v23 = vlaneseq
    %v24 = vshrl.u32 %v23, 7
    %v25 = vadd.s32 %v24, 8
    %v26 = vlaneseq
    %v27 = vand.u32 %v26, 127
    %v28 = vmul.u32 %v24, 2
    %v29 = vmul.u32 %v25, 2
    %v30 = vadd.s32 %v28, 1
    %v31 = vadd.s32 %v29, 1
    %vm32 = vcmp.eq.s32.totalorder %v27, %v28
    %vm33 = vcmp.eq.s32.totalorder %v27, %v29
    %vm34 = vcmp.eq.s32.totalorder %v27, %v30
    %vm35 = vcmp.eq.s32.totalorder %v27, %v31
    %v36 = vsel %vm32, 1, 0
    %v37 = vsel %vm33, 1, 0
    %v38 = vsel %vm34, 1, 0
    %v39 = vsel %vm35, 1, 0
    %v40 = vcvt.s32.f32 %v36
    %v41 = vcvt.s32.f32 %v37
    %v42 = vcvt.s32.f32 %v38
    %v43 = vcvt.s32.f32 %v39
    %v44 = vld [vmem:[#allocation2] sm:$0xff]
    %v45 = vld [vmem:[#allocation2 + $0x8] sm:$0xff]
    %v46 = vld [vmem:[#allocation2 + $0x40] sm:$0xff]
    %v47 = vld [vmem:[#allocation2 + $0x48] sm:$0xff]
    %s48 = scalar_lea.vmem [#allocation2], 16
    %v49 = vld [vmem:[%s48] sm:$0xff]
    %v50 = vld [vmem:[%s48 + $0x8] sm:$0xff]
    %v51 = vld [vmem:[%s48 + $0x40] sm:$0xff]
    %v52 = vld [vmem:[%s48 + $0x48] sm:$0xff]
    %57 = vrot.lane.b32.xlu0 %v49, 16
    %v58 = vpop.permute.xlu0 %57
    %59 = vrot.lane.b32.xlu0 %v50, 16
    %v60 = vpop.permute.xlu0 %59
    %61 = vrot.lane.b32.xlu0 %v51, 16
    %v62 = vpop.permute.xlu0 %61
    %63 = vrot.lane.b32.xlu0 %v52, 16
    %v64 = vpop.permute.xlu0 %63
    %vm69 = vcmask 130048
    %v70 = vsel %vm69, %v44, %v58
    %v71 = vsel %vm69, %v45, %v60
    %v72 = vsel %vm69, %v46, %v62
    %v73 = vsel %vm69, %v47, %v64
    %s74 = scalar_lea.vmem [#allocation2], 32
    %v75 = vld [vmem:[%s74] sm:$0xff]
    %v76 = vld [vmem:[%s74 + $0x8] sm:$0xff]
    %v77 = vld [vmem:[%s74 + $0x40] sm:$0xff]
    %v78 = vld [vmem:[%s74 + $0x48] sm:$0xff]
    %s79 = scalar_lea.vmem [#allocation2], 48
    %v80 = vld [vmem:[%s79] sm:$0xff]
    %v81 = vld [vmem:[%s79 + $0x8] sm:$0xff]
    %v82 = vld [vmem:[%s79 + $0x40] sm:$0xff]
    %v83 = vld [vmem:[%s79 + $0x48] sm:$0xff]
    %88 = vrot.lane.b32.xlu0 %v80, 16
    %v89 = vpop.permute.xlu0 %88
    %90 = vrot.lane.b32.xlu0 %v81, 16
    %v91 = vpop.permute.xlu0 %90
    %92 = vrot.lane.b32.xlu0 %v82, 16
    %v93 = vpop.permute.xlu0 %92
    %94 = vrot.lane.b32.xlu0 %v83, 16
    %v95 = vpop.permute.xlu0 %94
    %v100 = vsel %vm69, %v75, %v89
    %v101 = vsel %vm69, %v76, %v91
    %v102 = vsel %vm69, %v77, %v93
    %v103 = vsel %vm69, %v78, %v95
    %vm104 = vcmask 261120
    %v106 = vsel %vm104, %v70, 0
    %v109 = vsel %vm104, %v71, 0
    %v112 = vsel %vm104, %v72, 0
    %v115 = vsel %vm104, %v73, 0
    %v118 = vsel %vm104, %v100, 0
    %v121 = vsel %vm104, %v101, 0
    %v124 = vsel %vm104, %v102, 0
    %v127 = vsel %vm104, %v103, 0
    %129 = vmatprep.subr.mxu0 0.0
    %v130 = vand.u32 %v40, 4294901760
    %131 = vmatpush1.msra.mxu0 %v130
    %132 = vmatprep.subr.mxu0 0.0
    %v133 = vand.u32 %v41, 4294901760
    %134 = vmatpush1.msra.mxu0 %v133
    %135 = vmatprep.subr.mxu0 0.0
    %v136 = vand.u32 %v42, 4294901760
    %137 = vmatpush1.msra.mxu0 %v136
    %138 = vmatprep.subr.mxu0 0.0
    %v139 = vand.u32 %v43, 4294901760
    %140 = vmatpush1.msra.mxu0 %v139
    %141 = vmatprep.subr.mxu0 0.0
    %142 = vmatpush1.msra.mxu0 0.0
    %143 = vmatprep.subr.mxu0 0.0
    %144 = vmatpush1.msra.mxu0 0.0
    %145 = vmatprep.subr.mxu0 0.0
    %146 = vmatpush1.msra.mxu0 0.0
    %147 = vmatprep.subr.mxu0 0.0
    %148 = vmatpush1.msra.mxu0 0.0
    %149 = vmatprep.subr.mxu0 0.0
    %150 = vmatpush1.msra.mxu0 0.0
    %151 = vmatprep.subr.mxu0 0.0
    %152 = vmatpush1.msra.mxu0 0.0
    %153 = vmatprep.subr.mxu0 0.0
    %154 = vmatpush1.msra.mxu0 0.0
    %155 = vmatprep.subr.mxu0 0.0
    %156 = vmatpush1.msra.mxu0 0.0
    %157 = vmatprep.subr.mxu0 0.0
    %158 = vmatpush1.msra.mxu0 0.0
    %159 = vmatprep.subr.mxu0 0.0
    %160 = vmatpush1.msra.mxu0 0.0
    %161 = vmatprep.subr.mxu0 0.0
    %162 = vmatpush1.msra.mxu0 0.0
    %163 = vmatprep.subr.mxu0 0.0
    %164 = vmatpush1.msra.mxu0 0.0
    %165 = vmatprep.subr.mxu0 0.0
    %166 = vmatpush1.msra.mxu0 0.0
    %167 = vmatprep.subr.mxu0 0.0
    %168 = vmatpush1.msra.mxu0 0.0
    %169 = vmatprep.subr.mxu0 0.0
    %170 = vmatpush1.msra.mxu0 0.0
    %171 = vmatprep.subr.mxu0 0.0
    %172 = vmatpush1.msra.mxu0 0.0
    %173 = vmatprep.subr.mxu0 0.0
    %174 = vmatpush1.msra.mxu0 0.0
    %175 = vmatprep.subr.mxu0 0.0
    %176 = vmatpush1.msra.mxu0 0.0
    %177 = vmatprep.subr.mxu0 0.0
    %178 = vmatpush1.msra.mxu0 0.0
    %179 = vmatprep.subr.mxu0 0.0
    %180 = vmatpush1.msra.mxu0 0.0
    %181 = vmatprep.subr.mxu0 0.0
    %182 = vmatpush1.msra.mxu0 0.0
    %183 = vmatprep.subr.mxu0 0.0
    %184 = vmatpush1.msra.mxu0 0.0
    %185 = vmatprep.subr.mxu0 0.0
    %186 = vmatpush1.msra.mxu0 0.0
    %187 = vmatprep.subr.mxu0 0.0
    %188 = vmatpush1.msra.mxu0 0.0
    %189 = vmatprep.subr.mxu0 0.0
    %190 = vmatpush1.msra.mxu0 0.0
    %191 = vmatprep.subr.mxu0 0.0
    %192 = vmatpush1.msra.mxu0 0.0
    %193 = vmatprep.subr.mxu0 0.0
    %194 = vmatpush1.msra.mxu0 0.0
    %195 = vmatprep.subr.mxu0 0.0
    %196 = vmatpush1.msra.mxu0 0.0
    %197 = vmatprep.mubr.f32.mxu0 0.0
    %v198 = vand.u32 %v106, 4294901760
    %v199 = vsub.f32 %v106, %v198
    %v200 = vand.u32 %v199, 4294901760
    %v201 = vsub.f32 %v199, %v200
    %v202 = vand.u32 %v201, 4294901760
    %203 = vmatmul.mubr.f32.gmra.mrb[0].mxu0 %v202
    %v204 = vpop.f32.mrb[0].mxu0
    %v205 = vadd.f32 0.0, %v204
    %v206 = vpop.f32.mrb[0].mxu0
    %207 = vmatprep.mubr.f32.mxu0 0.0
    %v208 = vand.u32 %v109, 4294901760
    %v209 = vsub.f32 %v109, %v208
    %v210 = vand.u32 %v209, 4294901760
    %v211 = vsub.f32 %v209, %v210
    %v212 = vand.u32 %v211, 4294901760
    %213 = vmatmul.mubr.f32.gmra.mrb[0].mxu0 %v212
    %v214 = vpop.f32.mrb[0].mxu0
    %v215 = vadd.f32 0.0, %v214
    %v216 = vpop.f32.mrb[0].mxu0
    %217 = vmatprep.mubr.f32.mxu0 0.0
    %v218 = vand.u32 %v112, 4294901760
    %v219 = vsub.f32 %v112, %v218
    %v220 = vand.u32 %v219, 4294901760
    %v221 = vsub.f32 %v219, %v220
    %v222 = vand.u32 %v221, 4294901760
    %223 = vmatmul.mubr.f32.gmra.mrb[0].mxu0 %v222
    %v224 = vpop.f32.mrb[0].mxu0
    %v225 = vadd.f32 0.0, %v224
    %v226 = vpop.f32.mrb[0].mxu0
    %227 = vmatprep.mubr.f32.mxu0 0.0
    %v228 = vand.u32 %v115, 4294901760
    %v229 = vsub.f32 %v115, %v228
    %v230 = vand.u32 %v229, 4294901760
    %v231 = vsub.f32 %v229, %v230
    %v232 = vand.u32 %v231, 4294901760
    %233 = vmatmul.mubr.f32.gmra.mrb[0].mxu0 %v232
    %v234 = vpop.f32.mrb[0].mxu0
    %v235 = vadd.f32 0.0, %v234
    %v236 = vpop.f32.mrb[0].mxu0
    %237 = vmatprep.mubr.f32.mxu0 0.0
    %v238 = vand.u32 %v118, 4294901760
    %v239 = vsub.f32 %v118, %v238
    %v240 = vand.u32 %v239, 4294901760
    %v241 = vsub.f32 %v239, %v240
    %v242 = vand.u32 %v241, 4294901760
    %243 = vmatmul.mubr.f32.gmra.mrb[0].mxu0 %v242
    %v244 = vpop.f32.mrb[0].mxu0
    %v245 = vadd.f32 0.0, %v244
    %v246 = vpop.f32.mrb[0].mxu0
    %247 = vmatprep.mubr.f32.mxu0 0.0
    %v248 = vand.u32 %v121, 4294901760
    %v249 = vsub.f32 %v121, %v248
    %v250 = vand.u32 %v249, 4294901760
    %v251 = vsub.f32 %v249, %v250
    %v252 = vand.u32 %v251, 4294901760
    %253 = vmatmul.mubr.f32.gmra.mrb[0].mxu0 %v252
    %v254 = vpop.f32.mrb[0].mxu0
    %v255 = vadd.f32 0.0, %v254
    %v256 = vpop.f32.mrb[0].mxu0
    %257 = vmatprep.mubr.f32.mxu0 0.0
    %v258 = vand.u32 %v124, 4294901760
    %v259 = vsub.f32 %v124, %v258
    %v260 = vand.u32 %v259, 4294901760
    %v261 = vsub.f32 %v259, %v260
    %v262 = vand.u32 %v261, 4294901760
    %263 = vmatmul.mubr.f32.gmra.mrb[0].mxu0 %v262
    %v264 = vpop.f32.mrb[0].mxu0
    %v265 = vadd.f32 0.0, %v264
    %v266 = vpop.f32.mrb[0].mxu0
    %267 = vmatprep.mubr.f32.mxu0 0.0
    %v268 = vand.u32 %v127, 4294901760
    %v269 = vsub.f32 %v127, %v268
    %v270 = vand.u32 %v269, 4294901760
    %v271 = vsub.f32 %v269, %v270
    %v272 = vand.u32 %v271, 4294901760
    %273 = vmatmul.mubr.f32.gmra.mrb[0].mxu0 %v272
    %v274 = vpop.f32.mrb[0].mxu0
    %v275 = vadd.f32 0.0, %v274
    %v276 = vpop.f32.mrb[0].mxu0
    %277 = vdwg.mxu0
    %278 = vmatprep.subr.mxu0 0.0
    %v279 = vand.u32 %v40, 4294901760
    %v280 = vsub.f32 %v40, %v279
    %v281 = vand.u32 %v280, 4294901760
    %v282 = vsub.f32 %v280, %v281
    %v283 = vand.u32 %v282, 4294901760
    %284 = vmatpush1.msra.mxu0 %v283
    %285 = vmatprep.subr.mxu0 0.0
    %v286 = vand.u32 %v41, 4294901760
    %v287 = vsub.f32 %v41, %v286
    %v288 = vand.u32 %v287, 4294901760
    %v289 = vsub.f32 %v287, %v288
    %v290 = vand.u32 %v289, 4294901760
    %291 = vmatpush1.msra.mxu0 %v290
    %292 = vmatprep.subr.mxu0 0.0
    %v293 = vand.u32 %v42, 4294901760
    %v294 = vsub.f32 %v42, %v293
    %v295 = vand.u32 %v294, 4294901760
    %v296 = vsub.f32 %v294, %v295
    %v297 = vand.u32 %v296, 4294901760
    %298 = vmatpush1.msra.mxu0 %v297
    %299 = vmatprep.subr.mxu0 0.0
    %v300 = vand.u32 %v43, 4294901760
    %v301 = vsub.f32 %v43, %v300
    %v302 = vand.u32 %v301, 4294901760
    %v303 = vsub.f32 %v301, %v302
    %v304 = vand.u32 %v303, 4294901760
    %305 = vmatpush1.msra.mxu0 %v304
    %306 = vmatprep.subr.mxu0 0.0
    %307 = vmatpush1.msra.mxu0 0.0
    %308 = vmatprep.subr.mxu0 0.0
    %309 = vmatpush1.msra.mxu0 0.0
    %310 = vmatprep.subr.mxu0 0.0
    %311 = vmatpush1.msra.mxu0 0.0
    %312 = vmatprep.subr.mxu0 0.0
    %313 = vmatpush1.msra.mxu0 0.0
    %314 = vmatprep.subr.mxu0 0.0
    %315 = vmatpush1.msra.mxu0 0.0
    %316 = vmatprep.subr.mxu0 0.0
    %317 = vmatpush1.msra.mxu0 0.0
    %318 = vmatprep.subr.mxu0 0.0
    %319 = vmatpush1.msra.mxu0 0.0
    %320 = vmatprep.subr.mxu0 0.0
    %321 = vmatpush1.msra.mxu0 0.0
    %322 = vmatprep.subr.mxu0 0.0
    %323 = vmatpush1.msra.mxu0 0.0
    %324 = vmatprep.subr.mxu0 0.0
    %325 = vmatpush1.msra.mxu0 0.0
    %326 = vmatprep.subr.mxu0 0.0
    %327 = vmatpush1.msra.mxu0 0.0
    %328 = vmatprep.subr.mxu0 0.0
    %329 = vmatpush1.msra.mxu0 0.0
    %330 = vmatprep.subr.mxu0 0.0
    %331 = vmatpush1.msra.mxu0 0.0
    %332 = vmatprep.subr.mxu0 0.0
    %333 = vmatpush1.msra.mxu0 0.0
    %334 = vmatprep.subr.mxu0 0.0
    %335 = vmatpush1.msra.mxu0 0.0
    %336 = vmatprep.subr.mxu0 0.0
    %337 = vmatpush1.msra.mxu0 0.0
    %338 = vmatprep.subr.mxu0 0.0
    %339 = vmatpush1.msra.mxu0 0.0
    %340 = vmatprep.subr.mxu0 0.0
    %341 = vmatpush1.msra.mxu0 0.0
    %342 = vmatprep.subr.mxu0 0.0
    %343 = vmatpush1.msra.mxu0 0.0
    %344 = vmatprep.subr.mxu0 0.0
    %345 = vmatpush1.msra.mxu0 0.0
    %346 = vmatprep.subr.mxu0 0.0
    %347 = vmatpush1.msra.mxu0 0.0
    %348 = vmatprep.subr.mxu0 0.0
    %349 = vmatpush1.msra.mxu0 0.0
    %350 = vmatprep.subr.mxu0 0.0
    %351 = vmatpush1.msra.mxu0 0.0
    %352 = vmatprep.subr.mxu0 0.0
    %353 = vmatpush1.msra.mxu0 0.0
    %354 = vmatprep.subr.mxu0 0.0
    %355 = vmatpush1.msra.mxu0 0.0
    %356 = vmatprep.subr.mxu0 0.0
    %357 = vmatpush1.msra.mxu0 0.0
    %358 = vmatprep.subr.mxu0 0.0
    %359 = vmatpush1.msra.mxu0 0.0
    %360 = vmatprep.subr.mxu0 0.0
    %361 = vmatpush1.msra.mxu0 0.0
    %362 = vmatprep.mubr.f32.mxu0 0.0
    %v363 = vand.u32 %v106, 4294901760
    %364 = vmatmul.mubr.f32.gmra.mrb[0].mxu0 %v363
    %v365 = vpop.f32.mrb[0].mxu0
    %v366 = vadd.f32 %v205, %v365
    %v367 = vpop.f32.mrb[0].mxu0
    %368 = vmatprep.mubr.f32.mxu0 0.0
    %v369 = vand.u32 %v109, 4294901760
    %370 = vmatmul.mubr.f32.gmra.mrb[0].mxu0 %v369
    %v371 = vpop.f32.mrb[0].mxu0
    %v372 = vadd.f32 %v215, %v371
    %v373 = vpop.f32.mrb[0].mxu0
    %374 = vmatprep.mubr.f32.mxu0 0.0
    %v375 = vand.u32 %v112, 4294901760
    %376 = vmatmul.mubr.f32.gmra.mrb[0].mxu0 %v375
    %v377 = vpop.f32.mrb[0].mxu0
    %v378 = vadd.f32 %v225, %v377
    %v379 = vpop.f32.mrb[0].mxu0
    %380 = vmatprep.mubr.f32.mxu0 0.0
    %v381 = vand.u32 %v115, 4294901760
    %382 = vmatmul.mubr.f32.gmra.mrb[0].mxu0 %v381
    %v383 = vpop.f32.mrb[0].mxu0
    %v384 = vadd.f32 %v235, %v383
    %v385 = vpop.f32.mrb[0].mxu0
    %386 = vmatprep.mubr.f32.mxu0 0.0
    %v387 = vand.u32 %v118, 4294901760
    %388 = vmatmul.mubr.f32.gmra.mrb[0].mxu0 %v387
    %v389 = vpop.f32.mrb[0].mxu0
    %v390 = vadd.f32 %v245, %v389
    %v391 = vpop.f32.mrb[0].mxu0
    %392 = vmatprep.mubr.f32.mxu0 0.0
    %v393 = vand.u32 %v121, 4294901760
    %394 = vmatmul.mubr.f32.gmra.mrb[0].mxu0 %v393
    %v395 = vpop.f32.mrb[0].mxu0
    %v396 = vadd.f32 %v255, %v395
    %v397 = vpop.f32.mrb[0].mxu0
    %398 = vmatprep.mubr.f32.mxu0 0.0
    %v399 = vand.u32 %v124, 4294901760
    %400 = vmatmul.mubr.f32.gmra.mrb[0].mxu0 %v399
    %v401 = vpop.f32.mrb[0].mxu0
    %v402 = vadd.f32 %v265, %v401
    %v403 = vpop.f32.mrb[0].mxu0
    %404 = vmatprep.mubr.f32.mxu0 0.0
    %v405 = vand.u32 %v127, 4294901760
    %406 = vmatmul.mubr.f32.gmra.mrb[0].mxu0 %v405
    %v407 = vpop.f32.mrb[0].mxu0
    %v408 = vadd.f32 %v275, %v407
    %v409 = vpop.f32.mrb[0].mxu0
    %410 = vdwg.mxu0
    %411 = vmatprep.subr.mxu0 0.0
    %v412 = vand.u32 %v40, 4294901760
    %v413 = vsub.f32 %v40, %v412
    %414 = vmatpush1.msra.mxu0 %v413
    %415 = vmatprep.subr.mxu0 0.0
    %v416 = vand.u32 %v41, 4294901760
    %v417 = vsub.f32 %v41, %v416
    %418 = vmatpush1.msra.mxu0 %v417
    %419 = vmatprep.subr.mxu0 0.0
    %v420 = vand.u32 %v42, 4294901760
    %v421 = vsub.f32 %v42, %v420
    %422 = vmatpush1.msra.mxu0 %v421
    %423 = vmatprep.subr.mxu0 0.0
    %v424 = vand.u32 %v43, 4294901760
    %v425 = vsub.f32 %v43, %v424
    %426 = vmatpush1.msra.mxu0 %v425
    %427 = vmatprep.subr.mxu0 0.0
    %428 = vmatpush1.msra.mxu0 0.0
    %429 = vmatprep.subr.mxu0 0.0
    %430 = vmatpush1.msra.mxu0 0.0
    %431 = vmatprep.subr.mxu0 0.0
    %432 = vmatpush1.msra.mxu0 0.0
    %433 = vmatprep.subr.mxu0 0.0
    %434 = vmatpush1.msra.mxu0 0.0
    %435 = vmatprep.subr.mxu0 0.0
    %436 = vmatpush1.msra.mxu0 0.0
    %437 = vmatprep.subr.mxu0 0.0
    %438 = vmatpush1.msra.mxu0 0.0
    %439 = vmatprep.subr.mxu0 0.0
    %440 = vmatpush1.msra.mxu0 0.0
    %441 = vmatprep.subr.mxu0 0.0
    %442 = vmatpush1.msra.mxu0 0.0
    %443 = vmatprep.subr.mxu0 0.0
    %444 = vmatpush1.msra.mxu0 0.0
    %445 = vmatprep.subr.mxu0 0.0
    %446 = vmatpush1.msra.mxu0 0.0
    %447 = vmatprep.subr.mxu0 0.0
    %448 = vmatpush1.msra.mxu0 0.0
    %449 = vmatprep.subr.mxu0 0.0
    %450 = vmatpush1.msra.mxu0 0.0
    %451 = vmatprep.subr.mxu0 0.0
    %452 = vmatpush1.msra.mxu0 0.0
    %453 = vmatprep.subr.mxu0 0.0
    %454 = vmatpush1.msra.mxu0 0.0
    %455 = vmatprep.subr.mxu0 0.0
    %456 = vmatpush1.msra.mxu0 0.0
    %457 = vmatprep.subr.mxu0 0.0
    %458 = vmatpush1.msra.mxu0 0.0
    %459 = vmatprep.subr.mxu0 0.0
    %460 = vmatpush1.msra.mxu0 0.0
    %461 = vmatprep.subr.mxu0 0.0
    %462 = vmatpush1.msra.mxu0 0.0
    %463 = vmatprep.subr.mxu0 0.0
    %464 = vmatpush1.msra.mxu0 0.0
    %465 = vmatprep.subr.mxu0 0.0
    %466 = vmatpush1.msra.mxu0 0.0
    %467 = vmatprep.subr.mxu0 0.0
    %468 = vmatpush1.msra.mxu0 0.0
    %469 = vmatprep.subr.mxu0 0.0
    %470 = vmatpush1.msra.mxu0 0.0
    %471 = vmatprep.subr.mxu0 0.0
    %472 = vmatpush1.msra.mxu0 0.0
    %473 = vmatprep.subr.mxu0 0.0
    %474 = vmatpush1.msra.mxu0 0.0
    %475 = vmatprep.subr.mxu0 0.0
    %476 = vmatpush1.msra.mxu0 0.0
    %477 = vmatprep.subr.mxu0 0.0
    %478 = vmatpush1.msra.mxu0 0.0
    %479 = vmatprep.subr.mxu0 0.0
    %480 = vmatpush1.msra.mxu0 0.0
    %481 = vmatprep.subr.mxu0 0.0
    %482 = vmatpush1.msra.mxu0 0.0
    %483 = vmatprep.mubr.f32.mxu0 0.0
    %v484 = vand.u32 %v106, 4294901760
    %v485 = vsub.f32 %v106, %v484
    %486 = vmatmul.mubr.f32.gmra.mrb[0].mxu0 %v485
    %v487 = vpop.f32.mrb[0].mxu0
    %v488 = vadd.f32 %v366, %v487
    %v489 = vpop.f32.mrb[0].mxu0
    %490 = vmatprep.mubr.f32.mxu0 0.0
    %v491 = vand.u32 %v109, 4294901760
    %v492 = vsub.f32 %v109, %v491
    %493 = vmatmul.mubr.f32.gmra.mrb[0].mxu0 %v492
    %v494 = vpop.f32.mrb[0].mxu0
    %v495 = vadd.f32 %v372, %v494
    %v496 = vpop.f32.mrb[0].mxu0
    %497 = vmatprep.mubr.f32.mxu0 0.0
    %v498 = vand.u32 %v112, 4294901760
    %v499 = vsub.f32 %v112, %v498
    %500 = vmatmul.mubr.f32.gmra.mrb[0].mxu0 %v499
    %v501 = vpop.f32.mrb[0].mxu0
    %v502 = vadd.f32 %v378, %v501
    %v503 = vpop.f32.mrb[0].mxu0
    %504 = vmatprep.mubr.f32.mxu0 0.0
    %v505 = vand.u32 %v115, 4294901760
    %v506 = vsub.f32 %v115, %v505
    %507 = vmatmul.mubr.f32.gmra.mrb[0].mxu0 %v506
    %v508 = vpop.f32.mrb[0].mxu0
    %v509 = vadd.f32 %v384, %v508
    %v510 = vpop.f32.mrb[0].mxu0
    %511 = vmatprep.mubr.f32.mxu0 0.0
    %v512 = vand.u32 %v118, 4294901760
    %v513 = vsub.f32 %v118, %v512
    %514 = vmatmul.mubr.f32.gmra.mrb[0].mxu0 %v513
    %v515 = vpop.f32.mrb[0].mxu0
    %v516 = vadd.f32 %v390, %v515
    %v517 = vpop.f32.mrb[0].mxu0
    %518 = vmatprep.mubr.f32.mxu0 0.0
    %v519 = vand.u32 %v121, 4294901760
    %v520 = vsub.f32 %v121, %v519
    %521 = vmatmul.mubr.f32.gmra.mrb[0].mxu0 %v520
    %v522 = vpop.f32.mrb[0].mxu0
    %v523 = vadd.f32 %v396, %v522
    %v524 = vpop.f32.mrb[0].mxu0
    %525 = vmatprep.mubr.f32.mxu0 0.0
    %v526 = vand.u32 %v124, 4294901760
    %v527 = vsub.f32 %v124, %v526
    %528 = vmatmul.mubr.f32.gmra.mrb[0].mxu0 %v527
    %v529 = vpop.f32.mrb[0].mxu0
    %v530 = vadd.f32 %v402, %v529
    %v531 = vpop.f32.mrb[0].mxu0
    %532 = vmatprep.mubr.f32.mxu0 0.0
    %v533 = vand.u32 %v127, 4294901760
    %v534 = vsub.f32 %v127, %v533
    %535 = vmatmul.mubr.f32.gmra.mrb[0].mxu0 %v534
    %v536 = vpop.f32.mrb[0].mxu0
    %v537 = vadd.f32 %v408, %v536
    %v538 = vpop.f32.mrb[0].mxu0
    %539 = vdwg.mxu0
    %540 = vmatprep.subr.mxu0 0.0
    %v541 = vand.u32 %v40, 4294901760
    %542 = vmatpush1.msra.mxu0 %v541
    %543 = vmatprep.subr.mxu0 0.0
    %v544 = vand.u32 %v41, 4294901760
    %545 = vmatpush1.msra.mxu0 %v544
    %546 = vmatprep.subr.mxu0 0.0
    %v547 = vand.u32 %v42, 4294901760
    %548 = vmatpush1.msra.mxu0 %v547
    %549 = vmatprep.subr.mxu0 0.0
    %v550 = vand.u32 %v43, 4294901760
    %551 = vmatpush1.msra.mxu0 %v550
    %552 = vmatprep.subr.mxu0 0.0
    %553 = vmatpush1.msra.mxu0 0.0
    %554 = vmatprep.subr.mxu0 0.0
    %555 = vmatpush1.msra.mxu0 0.0
    %556 = vmatprep.subr.mxu0 0.0
    %557 = vmatpush1.msra.mxu0 0.0
    %558 = vmatprep.subr.mxu0 0.0
    %559 = vmatpush1.msra.mxu0 0.0
    %560 = vmatprep.subr.mxu0 0.0
    %561 = vmatpush1.msra.mxu0 0.0
    %562 = vmatprep.subr.mxu0 0.0
    %563 = vmatpush1.msra.mxu0 0.0
    %564 = vmatprep.subr.mxu0 0.0
    %565 = vmatpush1.msra.mxu0 0.0
    %566 = vmatprep.subr.mxu0 0.0
    %567 = vmatpush1.msra.mxu0 0.0
    %568 = vmatprep.subr.mxu0 0.0
    %569 = vmatpush1.msra.mxu0 0.0
    %570 = vmatprep.subr.mxu0 0.0
    %571 = vmatpush1.msra.mxu0 0.0
    %572 = vmatprep.subr.mxu0 0.0
    %573 = vmatpush1.msra.mxu0 0.0
    %574 = vmatprep.subr.mxu0 0.0
    %575 = vmatpush1.msra.mxu0 0.0
    %576 = vmatprep.subr.mxu0 0.0
    %577 = vmatpush1.msra.mxu0 0.0
    %578 = vmatprep.subr.mxu0 0.0
    %579 = vmatpush1.msra.mxu0 0.0
    %580 = vmatprep.subr.mxu0 0.0
    %581 = vmatpush1.msra.mxu0 0.0
    %582 = vmatprep.subr.mxu0 0.0
    %583 = vmatpush1.msra.mxu0 0.0
    %584 = vmatprep.subr.mxu0 0.0
    %585 = vmatpush1.msra.mxu0 0.0
    %586 = vmatprep.subr.mxu0 0.0
    %587 = vmatpush1.msra.mxu0 0.0
    %588 = vmatprep.subr.mxu0 0.0
    %589 = vmatpush1.msra.mxu0 0.0
    %590 = vmatprep.subr.mxu0 0.0
    %591 = vmatpush1.msra.mxu0 0.0
    %592 = vmatprep.subr.mxu0 0.0
    %593 = vmatpush1.msra.mxu0 0.0
    %594 = vmatprep.subr.mxu0 0.0
    %595 = vmatpush1.msra.mxu0 0.0
    %596 = vmatprep.subr.mxu0 0.0
    %597 = vmatpush1.msra.mxu0 0.0
    %598 = vmatprep.subr.mxu0 0.0
    %599 = vmatpush1.msra.mxu0 0.0
    %600 = vmatprep.subr.mxu0 0.0
    %601 = vmatpush1.msra.mxu0 0.0
    %602 = vmatprep.subr.mxu0 0.0
    %603 = vmatpush1.msra.mxu0 0.0
    %604 = vmatprep.subr.mxu0 0.0
    %605 = vmatpush1.msra.mxu0 0.0
    %606 = vmatprep.subr.mxu0 0.0
    %607 = vmatpush1.msra.mxu0 0.0
    %608 = vmatprep.mubr.f32.mxu0 0.0
    %v609 = vand.u32 %v106, 4294901760
    %v610 = vsub.f32 %v106, %v609
    %v611 = vand.u32 %v610, 4294901760
    %612 = vmatmul.mubr.f32.gmra.mrb[0].mxu0 %v611
    %v613 = vpop.f32.mrb[0].mxu0
    %v614 = vadd.f32 %v488, %v613
    %v615 = vpop.f32.mrb[0].mxu0
    %616 = vmatprep.mubr.f32.mxu0 0.0
    %v617 = vand.u32 %v109, 4294901760
    %v618 = vsub.f32 %v109, %v617
    %v619 = vand.u32 %v618, 4294901760
    %620 = vmatmul.mubr.f32.gmra.mrb[0].mxu0 %v619
    %v621 = vpop.f32.mrb[0].mxu0
    %v622 = vadd.f32 %v495, %v621
    %v623 = vpop.f32.mrb[0].mxu0
    %624 = vmatprep.mubr.f32.mxu0 0.0
    %v625 = vand.u32 %v112, 4294901760
    %v626 = vsub.f32 %v112, %v625
    %v627 = vand.u32 %v626, 4294901760
    %628 = vmatmul.mubr.f32.gmra.mrb[0].mxu0 %v627
    %v629 = vpop.f32.mrb[0].mxu0
    %v630 = vadd.f32 %v502, %v629
    %v631 = vpop.f32.mrb[0].mxu0
    %632 = vmatprep.mubr.f32.mxu0 0.0
    %v633 = vand.u32 %v115, 4294901760
    %v634 = vsub.f32 %v115, %v633
    %v635 = vand.u32 %v634, 4294901760
    %636 = vmatmul.mubr.f32.gmra.mrb[0].mxu0 %v635
    %v637 = vpop.f32.mrb[0].mxu0
    %v638 = vadd.f32 %v509, %v637
    %v639 = vpop.f32.mrb[0].mxu0
    %640 = vmatprep.mubr.f32.mxu0 0.0
    %v641 = vand.u32 %v118, 4294901760
    %v642 = vsub.f32 %v118, %v641
    %v643 = vand.u32 %v642, 4294901760
    %644 = vmatmul.mubr.f32.gmra.mrb[0].mxu0 %v643
    %v645 = vpop.f32.mrb[0].mxu0
    %v646 = vadd.f32 %v516, %v645
    %v647 = vpop.f32.mrb[0].mxu0
    %648 = vmatprep.mubr.f32.mxu0 0.0
    %v649 = vand.u32 %v121, 4294901760
    %v650 = vsub.f32 %v121, %v649
    %v651 = vand.u32 %v650, 4294901760
    %652 = vmatmul.mubr.f32.gmra.mrb[0].mxu0 %v651
    %v653 = vpop.f32.mrb[0].mxu0
    %v654 = vadd.f32 %v523, %v653
    %v655 = vpop.f32.mrb[0].mxu0
    %656 = vmatprep.mubr.f32.mxu0 0.0
    %v657 = vand.u32 %v124, 4294901760
    %v658 = vsub.f32 %v124, %v657
    %v659 = vand.u32 %v658, 4294901760
    %660 = vmatmul.mubr.f32.gmra.mrb[0].mxu0 %v659
    %v661 = vpop.f32.mrb[0].mxu0
    %v662 = vadd.f32 %v530, %v661
    %v663 = vpop.f32.mrb[0].mxu0
    %664 = vmatprep.mubr.f32.mxu0 0.0
    %v665 = vand.u32 %v127, 4294901760
    %v666 = vsub.f32 %v127, %v665
    %v667 = vand.u32 %v666, 4294901760
    %668 = vmatmul.mubr.f32.gmra.mrb[0].mxu0 %v667
    %v669 = vpop.f32.mrb[0].mxu0
    %v670 = vadd.f32 %v537, %v669
    %v671 = vpop.f32.mrb[0].mxu0
    %672 = vdwg.mxu0
    %673 = vmatprep.subr.mxu0 0.0
    %v674 = vand.u32 %v40, 4294901760
    %v675 = vsub.f32 %v40, %v674
    %v676 = vand.u32 %v675, 4294901760
    %677 = vmatpush1.msra.mxu0 %v676
    %678 = vmatprep.subr.mxu0 0.0
    %v679 = vand.u32 %v41, 4294901760
    %v680 = vsub.f32 %v41, %v679
    %v681 = vand.u32 %v680, 4294901760
    %682 = vmatpush1.msra.mxu0 %v681
    %683 = vmatprep.subr.mxu0 0.0
    %v684 = vand.u32 %v42, 4294901760
    %v685 = vsub.f32 %v42, %v684
    %v686 = vand.u32 %v685, 4294901760
    %687 = vmatpush1.msra.mxu0 %v686
    %688 = vmatprep.subr.mxu0 0.0
    %v689 = vand.u32 %v43, 4294901760
    %v690 = vsub.f32 %v43, %v689
    %v691 = vand.u32 %v690, 4294901760
    %692 = vmatpush1.msra.mxu0 %v691
    %693 = vmatprep.subr.mxu0 0.0
    %694 = vmatpush1.msra.mxu0 0.0
    %695 = vmatprep.subr.mxu0 0.0
    %696 = vmatpush1.msra.mxu0 0.0
    %697 = vmatprep.subr.mxu0 0.0
    %698 = vmatpush1.msra.mxu0 0.0
    %699 = vmatprep.subr.mxu0 0.0
    %700 = vmatpush1.msra.mxu0 0.0
    %701 = vmatprep.subr.mxu0 0.0
    %702 = vmatpush1.msra.mxu0 0.0
    %703 = vmatprep.subr.mxu0 0.0
    %704 = vmatpush1.msra.mxu0 0.0
    %705 = vmatprep.subr.mxu0 0.0
    %706 = vmatpush1.msra.mxu0 0.0
    %707 = vmatprep.subr.mxu0 0.0
    %708 = vmatpush1.msra.mxu0 0.0
    %709 = vmatprep.subr.mxu0 0.0
    %710 = vmatpush1.msra.mxu0 0.0
    %711 = vmatprep.subr.mxu0 0.0
    %712 = vmatpush1.msra.mxu0 0.0
    %713 = vmatprep.subr.mxu0 0.0
    %714 = vmatpush1.msra.mxu0 0.0
    %715 = vmatprep.subr.mxu0 0.0
    %716 = vmatpush1.msra.mxu0 0.0
    %717 = vmatprep.subr.mxu0 0.0
    %718 = vmatpush1.msra.mxu0 0.0
    %719 = vmatprep.subr.mxu0 0.0
    %720 = vmatpush1.msra.mxu0 0.0
    %721 = vmatprep.subr.mxu0 0.0
    %722 = vmatpush1.msra.mxu0 0.0
    %723 = vmatprep.subr.mxu0 0.0
    %724 = vmatpush1.msra.mxu0 0.0
    %725 = vmatprep.subr.mxu0 0.0
    %726 = vmatpush1.msra.mxu0 0.0
    %727 = vmatprep.subr.mxu0 0.0
    %728 = vmatpush1.msra.mxu0 0.0
    %729 = vmatprep.subr.mxu0 0.0
    %730 = vmatpush1.msra.mxu0 0.0
    %731 = vmatprep.subr.mxu0 0.0
    %732 = vmatpush1.msra.mxu0 0.0
    %733 = vmatprep.subr.mxu0 0.0
    %734 = vmatpush1.msra.mxu0 0.0
    %735 = vmatprep.subr.mxu0 0.0
    %736 = vmatpush1.msra.mxu0 0.0
    %737 = vmatprep.subr.mxu0 0.0
    %738 = vmatpush1.msra.mxu0 0.0
    %739 = vmatprep.subr.mxu0 0.0
    %740 = vmatpush1.msra.mxu0 0.0
    %741 = vmatprep.subr.mxu0 0.0
    %742 = vmatpush1.msra.mxu0 0.0
    %743 = vmatprep.subr.mxu0 0.0
    %744 = vmatpush1.msra.mxu0 0.0
    %745 = vmatprep.subr.mxu0 0.0
    %746 = vmatpush1.msra.mxu0 0.0
    %747 = vmatprep.subr.mxu0 0.0
    %748 = vmatpush1.msra.mxu0 0.0
    %749 = vmatprep.mubr.f32.mxu0 0.0
    %v750 = vand.u32 %v106, 4294901760
    %751 = vmatmul.mubr.f32.gmra.mrb[0].mxu0 %v750
    %v752 = vpop.f32.mrb[0].mxu0
    %v753 = vadd.f32 %v614, %v752
    %v754 = vpop.f32.mrb[0].mxu0
    %755 = vmatprep.mubr.f32.mxu0 0.0
    %v756 = vand.u32 %v109, 4294901760
    %757 = vmatmul.mubr.f32.gmra.mrb[0].mxu0 %v756
    %v758 = vpop.f32.mrb[0].mxu0
    %v759 = vadd.f32 %v622, %v758
    %v760 = vpop.f32.mrb[0].mxu0
    %761 = vmatprep.mubr.f32.mxu0 0.0
    %v762 = vand.u32 %v112, 4294901760
    %763 = vmatmul.mubr.f32.gmra.mrb[0].mxu0 %v762
    %v764 = vpop.f32.mrb[0].mxu0
    %v765 = vadd.f32 %v630, %v764
    %v766 = vpop.f32.mrb[0].mxu0
    %767 = vmatprep.mubr.f32.mxu0 0.0
    %v768 = vand.u32 %v115, 4294901760
    %769 = vmatmul.mubr.f32.gmra.mrb[0].mxu0 %v768
    %v770 = vpop.f32.mrb[0].mxu0
    %v771 = vadd.f32 %v638, %v770
    %v772 = vpop.f32.mrb[0].mxu0
    %773 = vmatprep.mubr.f32.mxu0 0.0
    %v774 = vand.u32 %v118, 4294901760
    %775 = vmatmul.mubr.f32.gmra.mrb[0].mxu0 %v774
    %v776 = vpop.f32.mrb[0].mxu0
    %v777 = vadd.f32 %v646, %v776
    %v778 = vpop.f32.mrb[0].mxu0
    %779 = vmatprep.mubr.f32.mxu0 0.0
    %v780 = vand.u32 %v121, 4294901760
    %781 = vmatmul.mubr.f32.gmra.mrb[0].mxu0 %v780
    %v782 = vpop.f32.mrb[0].mxu0
    %v783 = vadd.f32 %v654, %v782
    %v784 = vpop.f32.mrb[0].mxu0
    %785 = vmatprep.mubr.f32.mxu0 0.0
    %v786 = vand.u32 %v124, 4294901760
    %787 = vmatmul.mubr.f32.gmra.mrb[0].mxu0 %v786
    %v788 = vpop.f32.mrb[0].mxu0
    %v789 = vadd.f32 %v662, %v788
    %v790 = vpop.f32.mrb[0].mxu0
    %791 = vmatprep.mubr.f32.mxu0 0.0
    %v792 = vand.u32 %v127, 4294901760
    %793 = vmatmul.mubr.f32.gmra.mrb[0].mxu0 %v792
    %v794 = vpop.f32.mrb[0].mxu0
    %v795 = vadd.f32 %v670, %v794
    %v796 = vpop.f32.mrb[0].mxu0
    %797 = vdwg.mxu0
    %798 = vmatprep.subr.mxu0 0.0
    %v799 = vand.u32 %v40, 4294901760
    %800 = vmatpush1.msra.mxu0 %v799
    %801 = vmatprep.subr.mxu0 0.0
    %v802 = vand.u32 %v41, 4294901760
    %803 = vmatpush1.msra.mxu0 %v802
    %804 = vmatprep.subr.mxu0 0.0
    %v805 = vand.u32 %v42, 4294901760
    %806 = vmatpush1.msra.mxu0 %v805
    %807 = vmatprep.subr.mxu0 0.0
    %v808 = vand.u32 %v43, 4294901760
    %809 = vmatpush1.msra.mxu0 %v808
    %810 = vmatprep.subr.mxu0 0.0
    %811 = vmatpush1.msra.mxu0 0.0
    %812 = vmatprep.subr.mxu0 0.0
    %813 = vmatpush1.msra.mxu0 0.0
    %814 = vmatprep.subr.mxu0 0.0
    %815 = vmatpush1.msra.mxu0 0.0
    %816 = vmatprep.subr.mxu0 0.0
    %817 = vmatpush1.msra.mxu0 0.0
    %818 = vmatprep.subr.mxu0 0.0
    %819 = vmatpush1.msra.mxu0 0.0
    %820 = vmatprep.subr.mxu0 0.0
    %821 = vmatpush1.msra.mxu0 0.0
    %822 = vmatprep.subr.mxu0 0.0
    %823 = vmatpush1.msra.mxu0 0.0
    %824 = vmatprep.subr.mxu0 0.0
    %825 = vmatpush1.msra.mxu0 0.0
    %826 = vmatprep.subr.mxu0 0.0
    %827 = vmatpush1.msra.mxu0 0.0
    %828 = vmatprep.subr.mxu0 0.0
    %829 = vmatpush1.msra.mxu0 0.0
    %830 = vmatprep.subr.mxu0 0.0
    %831 = vmatpush1.msra.mxu0 0.0
    %832 = vmatprep.subr.mxu0 0.0
    %833 = vmatpush1.msra.mxu0 0.0
    %834 = vmatprep.subr.mxu0 0.0
    %835 = vmatpush1.msra.mxu0 0.0
    %836 = vmatprep.subr.mxu0 0.0
    %837 = vmatpush1.msra.mxu0 0.0
    %838 = vmatprep.subr.mxu0 0.0
    %839 = vmatpush1.msra.mxu0 0.0
    %840 = vmatprep.subr.mxu0 0.0
    %841 = vmatpush1.msra.mxu0 0.0
    %842 = vmatprep.subr.mxu0 0.0
    %843 = vmatpush1.msra.mxu0 0.0
    %844 = vmatprep.subr.mxu0 0.0
    %845 = vmatpush1.msra.mxu0 0.0
    %846 = vmatprep.subr.mxu0 0.0
    %847 = vmatpush1.msra.mxu0 0.0
    %848 = vmatprep.subr.mxu0 0.0
    %849 = vmatpush1.msra.mxu0 0.0
    %850 = vmatprep.subr.mxu0 0.0
    %851 = vmatpush1.msra.mxu0 0.0
    %852 = vmatprep.subr.mxu0 0.0
    %853 = vmatpush1.msra.mxu0 0.0
    %854 = vmatprep.subr.mxu0 0.0
    %855 = vmatpush1.msra.mxu0 0.0
    %856 = vmatprep.subr.mxu0 0.0
    %857 = vmatpush1.msra.mxu0 0.0
    %858 = vmatprep.subr.mxu0 0.0
    %859 = vmatpush1.msra.mxu0 0.0
    %860 = vmatprep.subr.mxu0 0.0
    %861 = vmatpush1.msra.mxu0 0.0
    %862 = vmatprep.subr.mxu0 0.0
    %863 = vmatpush1.msra.mxu0 0.0
    %864 = vmatprep.subr.mxu0 0.0
    %865 = vmatpush1.msra.mxu0 0.0
    %866 = vmatprep.mubr.f32.mxu0 0.0
    %v867 = vand.u32 %v106, 4294901760
    %868 = vmatmul.mubr.f32.gmra.mrb[0].mxu0 %v867
    %v869 = vpop.f32.mrb[0].mxu0
    %v870 = vadd.f32 %v753, %v869
    %v871 = vpop.f32.mrb[0].mxu0
    %872 = vmatprep.mubr.f32.mxu0 0.0
    %v873 = vand.u32 %v109, 4294901760
    %874 = vmatmul.mubr.f32.gmra.mrb[0].mxu0 %v873
    %v875 = vpop.f32.mrb[0].mxu0
    %v876 = vadd.f32 %v759, %v875
    %v877 = vpop.f32.mrb[0].mxu0
    %878 = vmatprep.mubr.f32.mxu0 0.0
    %v879 = vand.u32 %v112, 4294901760
    %880 = vmatmul.mubr.f32.gmra.mrb[0].mxu0 %v879
    %v881 = vpop.f32.mrb[0].mxu0
    %v882 = vadd.f32 %v765, %v881
    %v883 = vpop.f32.mrb[0].mxu0
    %884 = vmatprep.mubr.f32.mxu0 0.0
    %v885 = vand.u32 %v115, 4294901760
    %886 = vmatmul.mubr.f32.gmra.mrb[0].mxu0 %v885
    %v887 = vpop.f32.mrb[0].mxu0
    %v888 = vadd.f32 %v771, %v887
    %v889 = vpop.f32.mrb[0].mxu0
    %890 = vmatprep.mubr.f32.mxu0 0.0
    %v891 = vand.u32 %v118, 4294901760
    %892 = vmatmul.mubr.f32.gmra.mrb[0].mxu0 %v891
    %v893 = vpop.f32.mrb[0].mxu0
    %v894 = vadd.f32 %v777, %v893
    %v895 = vpop.f32.mrb[0].mxu0
    %896 = vmatprep.mubr.f32.mxu0 0.0
    %v897 = vand.u32 %v121, 4294901760
    %898 = vmatmul.mubr.f32.gmra.mrb[0].mxu0 %v897
    %v899 = vpop.f32.mrb[0].mxu0
    %v900 = vadd.f32 %v783, %v899
    %v901 = vpop.f32.mrb[0].mxu0
    %902 = vmatprep.mubr.f32.mxu0 0.0
    %v903 = vand.u32 %v124, 4294901760
    %904 = vmatmul.mubr.f32.gmra.mrb[0].mxu0 %v903
    %v905 = vpop.f32.mrb[0].mxu0
    %v906 = vadd.f32 %v789, %v905
    %v907 = vpop.f32.mrb[0].mxu0
    %908 = vmatprep.mubr.f32.mxu0 0.0
    %v909 = vand.u32 %v127, 4294901760
    %910 = vmatmul.mubr.f32.gmra.mrb[0].mxu0 %v909
    %v911 = vpop.f32.mrb[0].mxu0
    %v912 = vadd.f32 %v795, %v911
    %v913 = vpop.f32.mrb[0].mxu0
    %914 = vdwg.mxu0
    %919 = vrot.lane.b32.xlu0 %v894, 32
    %v920 = vpop.permute.xlu0 %919
    %921 = vrot.lane.b32.xlu0 %v900, 32
    %v922 = vpop.permute.xlu0 %921
    %923 = vrot.lane.b32.xlu0 %v906, 32
    %v924 = vpop.permute.xlu0 %923
    %925 = vrot.lane.b32.xlu0 %v912, 32
    %v926 = vpop.permute.xlu0 %925
    %v931 = vsel %vm104, %v870, %v920
    %v932 = vsel %vm104, %v876, %v922
    %v933 = vsel %vm104, %v882, %v924
    %v934 = vsel %vm104, %v888, %v926
    %vm935 = vcmask 523264
    %936 = vst.msk [vmem:[#allocation5] sm:$0xff] %vm935, %v931
    %937 = vst.msk [vmem:[#allocation5 + $0x8] sm:$0xff] %vm935, %v932
    %938 = vst.msk [vmem:[#allocation5 + $0x10] sm:$0xff] %vm935, %v933
    %939 = vst.msk [vmem:[#allocation5 + $0x18] sm:$0xff] %vm935, %v934
    // Predicated region
    $region10: #{tpu_custom_call.1} parent=1 // pred_check
      _
    $region11: #{tpu_custom_call.1} parent=1 // pred_check_branch
      %941 = sbr.rel (0) target = $region13
    $region12: #{tpu_custom_call.1} parent=1 // pred_region
      %s943 = ssub.s32 512, 512
      %944 = vsyncadd [#allocation4], %s943
      %s945 = sshll.u32 [#allocation5], 4
      %s946 = int_to_ptr.vmem [resolvable:$true] %s945
      %951 = dma.vmem_to_hbm [thread:$0]  %s946, 512, %s1, [#allocation4], 128, 128, 8
    $region13: #{tpu_custom_call.1} parent=1 // pred_fallthru
      _
    // Predicated region
    $region14: #{tpu_custom_call.1} parent=1 // pred_check
      _
    $region15: #{tpu_custom_call.1} parent=1 // pred_check_branch
      %953 = sbr.rel (0) target = $region17
    $region16: #{tpu_custom_call.1} parent=1 // pred_region
      %954 = dma.done [#allocation4], 512
    $region17: #{tpu_custom_call.1} parent=1 // pred_fallthru
      _
    %955 = vsyncpa [#allocation3], 1
    %956 = vsyncpa [#allocation4], 1

</llo_original>
